<compile_context>
chip_gen: v7x
topology: tpu7x:2x2x1
jax: 0.10.0
libtpu: 0.0.40
codegen_flags: <defaults>
</compile_context>

<pallas_src>
import jax
import jax.numpy as jnp
import numpy as np
from jax.experimental import pallas as pl
from jax.experimental.pallas import tpu as pltpu

# Lane-aligned (padded) dims.
_H1_PAD = 512    # 400 -> 512
_H2_PAD = 384    # 300 -> 384
_OUT_PAD = 128   # 1   -> 128


def _round_up(x, m):
    return (x + m - 1) // m * m


def actor_kernel(x_ref, w1_ref, b1_ref, w2_ref, b2_ref, w3_ref, b3_ref, o_ref):
    # fc1 + relu  (MXU matmul, f32 accumulation; bias/relu on the VPU in f32)
    h1 = jnp.dot(x_ref[...], w1_ref[...], preferred_element_type=jnp.float32) + b1_ref[...]
    h1 = jnp.maximum(h1, 0.0)

    # fc2 + relu
    h2 = jnp.dot(h1.astype(w2_ref.dtype), w2_ref[...],
                 preferred_element_type=jnp.float32) + b2_ref[...]
    h2 = jnp.maximum(h2, 0.0)

    # fc3 + tanh  (N padded to 128 -> lane-dense, unmasked stores)
    h3 = jnp.dot(h2.astype(w3_ref.dtype), w3_ref[...],
                 preferred_element_type=jnp.float32) + b3_ref[...]
    o_ref[...] = jnp.tanh(h3).astype(o_ref.dtype)


def init_actor_params(key, n_states, n_hidden1=400, n_hidden2=300, initial_w=0.003):
    """Init matching the PyTorch module: uniform(-1/sqrt(size[0]), ...) where
    fc.weight is (out, in), so the bound is 1/sqrt(out_features); fc3 uses
    uniform(-initial_w, initial_w). Weights stored pre-transposed to (in, out)."""
    ks = jax.random.split(key, 6)

    def uni(k, shape, bound):
        return jax.random.uniform(k, shape, jnp.float32, -bound, bound)

    v1 = 1.0 / np.sqrt(n_hidden1)   # fc1.weight.size()[0] == 400
    v2 = 1.0 / np.sqrt(n_hidden2)   # fc2.weight.size()[0] == 300

    return {
        "w1": uni(ks[0], (n_states, n_hidden1), v1),
        "b1": uni(ks[1], (1, n_hidden1), v1),
        "w2": uni(ks[2], (n_hidden1, n_hidden2), v2),
        "b2": uni(ks[3], (1, n_hidden2), v2),
        "w3": uni(ks[4], (n_hidden2, 1), initial_w),
        "b3": uni(ks[5], (1, 1), initial_w),
    }


def pad_actor_params(params, use_bf16_matmul=False):
    """Zero-pad weights/biases to lane-aligned shapes (exact: relu(0)=0,
    zero K-rows contribute nothing). Optionally cast matmul operands to bf16
    (f32 accumulation is kept inside the kernel)."""
    w1, b1 = params["w1"], params["b1"]
    w2, b2 = params["w2"], params["b2"]
    w3, b3 = params["w3"], params["b3"]
    n_states, h1 = w1.shape
    h2 = w2.shape[1]

    w1p = jnp.zeros((n_states, _H1_PAD), jnp.float32).at[:, :h1].set(w1)
    b1p = jnp.zeros((1, _H1_PAD), jnp.float32).at[:, :h1].set(b1)
    w2p = jnp.zeros((_H1_PAD, _H2_PAD), jnp.float32).at[:h1, :h2].set(w2)
    b2p = jnp.zeros((1, _H2_PAD), jnp.float32).at[:, :h2].set(b2)
    w3p = jnp.zeros((_H2_PAD, _OUT_PAD), jnp.float32).at[:h2, :1].set(w3)
    b3p = jnp.zeros((1, _OUT_PAD), jnp.float32).at[:, :1].set(b3)

    if use_bf16_matmul:
        w1p = w1p.astype(jnp.bfloat16)
        w2p = w2p.astype(jnp.bfloat16)
        w3p = w3p.astype(jnp.bfloat16)

    return {"w1": w1p, "b1": b1p, "w2": w2p, "b2": b2p, "w3": w3p, "b3": b3p}


def actor_forward(state, padded_params, *, block_b=256):
    """state: (B, n_states) float32. padded_params: output of pad_actor_params."""
    B, n_states = state.shape
    w1, b1 = padded_params["w1"], padded_params["b1"]
    w2, b2 = padded_params["w2"], padded_params["b2"]
    w3, b3 = padded_params["w3"], padded_params["b3"]

    # Batch tile: at least a full sublane group (8 rows), at most block_b.
    tm = min(block_b, _round_up(B, 8))
    b_pad = _round_up(B, tm)

    x = state
    if w1.dtype == jnp.bfloat16:
        x = x.astype(jnp.bfloat16)
    if b_pad != B:
        x = jnp.pad(x, ((0, b_pad - B), (0, 0)))

    grid = (b_pad // tm,)

    # Weights/biases: constant index_map -> stay resident in VMEM across steps.
    resident = lambda shape: pl.BlockSpec(shape, lambda i: (0, 0))

    out = pl.pallas_call(
        actor_kernel,
        out_shape=jax.ShapeDtypeStruct((b_pad, _OUT_PAD), jnp.float32),
        grid=grid,
        in_specs=[
            pl.BlockSpec((tm, n_states), lambda i: (i, 0)),   # state: batch-blocked
            resident(w1.shape), resident(b1.shape),
            resident(w2.shape), resident(b2.shape),
            resident(w3.shape), resident(b3.shape),
        ],
        out_specs=pl.BlockSpec((tm, _OUT_PAD), lambda i: (i, 0)),
        compiler_params=pltpu.CompilerParams(
            dimension_semantics=("parallel",),
        ),
    )(x, w1, b1, w2, b2, w3, b3)

    return out[:B, :1]


def actor_reference(state, params):
    """Pure-JAX reference (unpadded) for correctness check."""
    h1 = jnp.maximum(state @ params["w1"] + params["b1"], 0.0)
    h2 = jnp.maximum(h1 @ params["w2"] + params["b2"], 0.0)
    return jnp.tanh(h2 @ params["w3"] + params["b3"])


if __name__ == "__main__":
    key = jax.random.PRNGKey(0)
    k_param, k_state1, k_state2 = jax.random.split(key, 3)

    n_states = 8  # n_state = (8,) in the module's terms
    params = init_actor_params(k_param, n_states)
    pparams = pad_actor_params(params, use_bf16_matmul=False)

    # Small-batch check (grid of 1 tile, padded batch 2 -> 8).
    B = 2
    state = jax.random.normal(k_state1, (B, n_states), dtype=jnp.float32)
    out = jax.block_until_ready(actor_forward(state, pparams))
    ref = actor_reference(state, params)
    assert out.shape == (B, 1)
    np.testing.assert_allclose(np.asarray(out), np.asarray(ref), rtol=1e-5, atol=1e-5)

    # Multi-tile check (exercises the batch grid + pipelining + padding path).
    B2 = 300
    state2 = jax.random.normal(k_state2, (B2, n_states), dtype=jnp.float32)
    out2 = jax.block_until_ready(actor_forward(state2, pparams, block_b=128))
    ref2 = actor_reference(state2, params)
    assert out2.shape == (B2, 1)
    np.testing.assert_allclose(np.asarray(out2), np.asarray(ref2), rtol=1e-5, atol=1e-5)

    print("KERNEL_OK")
</pallas_src>

<mosaic_0001>
module attributes {stable_mosaic.version = 11 : i64} {
  func.func @actor_kernel(%arg0: i32, %arg1: memref<8x8xf32, #tpu.memory_space<vmem>>, %arg2: memref<8x512xf32, #tpu.memory_space<vmem>>, %arg3: memref<1x512xf32, #tpu.memory_space<vmem>>, %arg4: memref<512x384xf32, #tpu.memory_space<vmem>>, %arg5: memref<1x384xf32, #tpu.memory_space<vmem>>, %arg6: memref<384x128xf32, #tpu.memory_space<vmem>>, %arg7: memref<1x128xf32, #tpu.memory_space<vmem>>, %arg8: memref<8x128xf32, #tpu.memory_space<vmem>>) attributes {dimension_semantics = [#tpu.dimension_semantics<parallel>], iteration_bounds = array<i64: 1>, scalar_prefetch = 0 : i64, scratch_operands = 0 : i64, tpu.core_type = #tpu.core_type<tc>, window_params = [{transform_indices = @transform_0, window_bounds = array<i64: 8, 8>}, {pipeline_mode = #tpu.pipeline_mode<synchronous>, transform_indices = @transform_1, window_bounds = array<i64: 8, 512>}, {pipeline_mode = #tpu.pipeline_mode<synchronous>, transform_indices = @transform_2, window_bounds = array<i64: 1, 512>}, {pipeline_mode = #tpu.pipeline_mode<synchronous>, transform_indices = @transform_3, window_bounds = array<i64: 512, 384>}, {pipeline_mode = #tpu.pipeline_mode<synchronous>, transform_indices = @transform_4, window_bounds = array<i64: 1, 384>}, {pipeline_mode = #tpu.pipeline_mode<synchronous>, transform_indices = @transform_5, window_bounds = array<i64: 384, 128>}, {pipeline_mode = #tpu.pipeline_mode<synchronous>, transform_indices = @transform_6, window_bounds = array<i64: 1, 128>}, {transform_indices = @transform_7, window_bounds = array<i64: 8, 128>}]} {
    %c0 = arith.constant 0 : index
    %c0_0 = arith.constant 0 : index
    %0 = vector.load %arg1[%c0, %c0_0] : memref<8x8xf32, #tpu.memory_space<vmem>>, vector<8x8xf32>
    %c0_1 = arith.constant 0 : index
    %c0_2 = arith.constant 0 : index
    %1 = vector.load %arg2[%c0_1, %c0_2] : memref<8x512xf32, #tpu.memory_space<vmem>>, vector<8x512xf32>
    %cst = arith.constant dense<0.000000e+00> : vector<8x512xf32>
    %2 = tpu.matmul %0, %1, %cst {dimension_numbers = #tpu.dot_dimension_numbers<[1], [0], [0], [1], [0, 0, 1, 1], [], []>} : vector<8x8xf32>, vector<8x512xf32>, vector<8x512xf32> -> vector<8x512xf32>
    %c0_3 = arith.constant 0 : index
    %c0_4 = arith.constant 0 : index
    %3 = vector.load %arg3[%c0_3, %c0_4] : memref<1x512xf32, #tpu.memory_space<vmem>>, vector<1x512xf32>
    %4 = vector.broadcast %3 : vector<1x512xf32> to vector<8x512xf32>
    %5 = arith.addf %2, %4 : vector<8x512xf32>
    %cst_5 = arith.constant 0.000000e+00 : f32
    %6 = vector.broadcast %cst_5 : f32 to vector<8x512xf32>
    %7 = arith.maximumf %5, %6 : vector<8x512xf32>
    %c0_6 = arith.constant 0 : index
    %c0_7 = arith.constant 0 : index
    %8 = vector.load %arg4[%c0_6, %c0_7] : memref<512x384xf32, #tpu.memory_space<vmem>>, vector<512x384xf32>
    %cst_8 = arith.constant dense<0.000000e+00> : vector<8x384xf32>
    %9 = tpu.matmul %7, %8, %cst_8 {dimension_numbers = #tpu.dot_dimension_numbers<[1], [0], [0], [1], [0, 0, 1, 1], [], []>} : vector<8x512xf32>, vector<512x384xf32>, vector<8x384xf32> -> vector<8x384xf32>
    %c0_9 = arith.constant 0 : index
    %c0_10 = arith.constant 0 : index
    %10 = vector.load %arg5[%c0_9, %c0_10] : memref<1x384xf32, #tpu.memory_space<vmem>>, vector<1x384xf32>
    %11 = vector.broadcast %10 : vector<1x384xf32> to vector<8x384xf32>
    %12 = arith.addf %9, %11 : vector<8x384xf32>
    %cst_11 = arith.constant 0.000000e+00 : f32
    %13 = vector.broadcast %cst_11 : f32 to vector<8x384xf32>
    %14 = arith.maximumf %12, %13 : vector<8x384xf32>
    %c0_12 = arith.constant 0 : index
    %c0_13 = arith.constant 0 : index
    %15 = vector.load %arg6[%c0_12, %c0_13] : memref<384x128xf32, #tpu.memory_space<vmem>>, vector<384x128xf32>
    %cst_14 = arith.constant dense<0.000000e+00> : vector<8x128xf32>
    %16 = tpu.matmul %14, %15, %cst_14 {dimension_numbers = #tpu.dot_dimension_numbers<[1], [0], [0], [1], [0, 0, 1, 1], [], []>} : vector<8x384xf32>, vector<384x128xf32>, vector<8x128xf32> -> vector<8x128xf32>
    %c0_15 = arith.constant 0 : index
    %c0_16 = arith.constant 0 : index
    %17 = vector.load %arg7[%c0_15, %c0_16] : memref<1x128xf32, #tpu.memory_space<vmem>>, vector<1x128xf32>
    %18 = vector.broadcast %17 : vector<1x128xf32> to vector<8x128xf32>
    %19 = arith.addf %16, %18 : vector<8x128xf32>
    %20 = math.tanh %19 : vector<8x128xf32>
    %c0_17 = arith.constant 0 : index
    %c0_18 = arith.constant 0 : index
    %21 = vector.load %arg8[%c0_17, %c0_18] : memref<8x128xf32, #tpu.memory_space<vmem>>, vector<8x128xf32>
    tpu.vector_store %arg8[%c0_17, %c0_18], %20 {strides = array<i32>} : memref<8x128xf32, #tpu.memory_space<vmem>>, vector<8x128xf32>,
    return
  }
  func.func @transform_0(%arg0: i32) -> (i32, i32) {
    %c0_i32 = arith.constant 0 : i32
    %c0_i32_0 = arith.constant 0 : i32
    return %arg0, %c0_i32 : i32, i32
  }
  func.func @transform_1(%arg0: i32) -> (i32, i32) {
    %c0_i32 = arith.constant 0 : i32
    %c0_i32_0 = arith.constant 0 : i32
    %c0_i32_1 = arith.constant 0 : i32
    return %c0_i32, %c0_i32_0 : i32, i32
  }
  func.func @transform_2(%arg0: i32) -> (i32, i32) {
    %c0_i32 = arith.constant 0 : i32
    %c0_i32_0 = arith.constant 0 : i32
    %c0_i32_1 = arith.constant 0 : i32
    return %c0_i32, %c0_i32_0 : i32, i32
  }
  func.func @transform_3(%arg0: i32) -> (i32, i32) {
    %c0_i32 = arith.constant 0 : i32
    %c0_i32_0 = arith.constant 0 : i32
    %c0_i32_1 = arith.constant 0 : i32
    return %c0_i32, %c0_i32_0 : i32, i32
  }
  func.func @transform_4(%arg0: i32) -> (i32, i32) {
    %c0_i32 = arith.constant 0 : i32
    %c0_i32_0 = arith.constant 0 : i32
    %c0_i32_1 = arith.constant 0 : i32
    return %c0_i32, %c0_i32_0 : i32, i32
  }
  func.func @transform_5(%arg0: i32) -> (i32, i32) {
    %c0_i32 = arith.constant 0 : i32
    %c0_i32_0 = arith.constant 0 : i32
    %c0_i32_1 = arith.constant 0 : i32
    return %c0_i32, %c0_i32_0 : i32, i32
  }
  func.func @transform_6(%arg0: i32) -> (i32, i32) {
    %c0_i32 = arith.constant 0 : i32
    %c0_i32_0 = arith.constant 0 : i32
    %c0_i32_1 = arith.constant 0 : i32
    return %c0_i32, %c0_i32_0 : i32, i32
  }
  func.func @transform_7(%arg0: i32) -> (i32, i32) {
    %c0_i32 = arith.constant 0 : i32
    %c0_i32_0 = arith.constant 0 : i32
    return %arg0, %c0_i32 : i32, i32
  }
}

</mosaic_0001>

<llo_original>
// kernel: tpu_custom_call.1
$region0: #{tpu_custom_call.1}
  #allocation0 [shape = 'u32[]', space=smem, size = 0x4, offset = 0x4, fixed_abs, tag = 'smem constant byte address 0x4 - core index']
  #allocation1 [shape = 'u32[144,128]{1,0:T(1,128)}', space=vmem, size = 0x12000, scoped, tag = 'internal scratch']
  %s0 = inlined_call_operand.hbm [shape: f32[8,8], index: 0, kind: input, shape index: {}]
  %s1 = inlined_call_operand.hbm [shape: f32[8,512], index: 1, kind: input, shape index: {}]
  %s2 = inlined_call_operand.vmem [shape: f32[1,512], index: 2, kind: input, shape index: {}]
  %s3 = inlined_call_operand.hbm [shape: f32[512,384], index: 3, kind: input, shape index: {}]
  %s4 = inlined_call_operand.vmem [shape: f32[1,384], index: 4, kind: input, shape index: {}]
  %s5 = inlined_call_operand.hbm [shape: f32[384,128], index: 5, kind: input, shape index: {}]
  %s6 = inlined_call_operand.vmem [shape: f32[1,128], index: 6, kind: input, shape index: {}]
  %s7 = inlined_call_operand.hbm [shape: f32[8,128], index: 7, kind: output, shape index: {}]
  %s8 = sld [smem:[#allocation0]]
  $region54: #{tpu_custom_call.1} parent=0
    _
  %s10 = ssub.s32 1, %s8
  %s11 = scalar_select 0, %s10, %s8
  $region1: #{tpu_custom_call.1} parent=0
    #allocation2 [shape = 'u8[4096]{0}', space=vmem, size = 0x1000, scoped, tag = 'input window, operand 0, single buffered']
    #allocation3 [shape = 's32[1]{0}', space=sflag, size = 0x4, scoped, tag = 'scoped memory for tpu_custom_call.1']
    #allocation4 [shape = 's32[1]{0}', space=sflag, size = 0x4, scoped, tag = 'scoped memory for tpu_custom_call.1']
    #allocation5 [shape = 'u8[16384]{0}', space=vmem, size = 0x4000, scoped, tag = 'input window, operand 1, single buffered']
    #allocation6 [shape = 's32[1]{0}', space=sflag, size = 0x4, scoped, tag = 'scoped memory for tpu_custom_call.1']
    #allocation7 [shape = 'u8[786432]{0}', space=vmem, size = 0xc0000, scoped, tag = 'input window, operand 3, single buffered']
    #allocation8 [shape = 'u8[196608]{0}', space=vmem, size = 0x30000, scoped, tag = 'input window, operand 5, single buffered']
    #allocation9 [shape = 's32[1]{0}', space=sflag, size = 0x4, scoped, tag = 'scoped memory for tpu_custom_call.1']
    #allocation10 [shape = 'u8[4096]{0}', space=vmem, size = 0x1000, scoped, tag = 'output window, operand 0, single buffered']
    %12 = vsyncpa [#allocation3], 0
    %13 = vsyncpa [#allocation6], 0
    %14 = vsyncpa [#allocation9], 0
    %15 = vsyncpa [#allocation4], 0
    // Predicated region
    $region2: #{tpu_custom_call.1} parent=1 // pred_check
      _
    $region3: #{tpu_custom_call.1} parent=1 // pred_check_branch
      %17 = sbr.rel (0) target = $region5
    $region4: #{tpu_custom_call.1} parent=1 // pred_region
      %s19 = ssub.s32 128, 128
      %20 = vsyncadd [#allocation3], %s19
      %s22 = sshll.u32 [#allocation2], 4
      %s23 = int_to_ptr.vmem [resolvable:$true] %s22
      %25 = dma.hbm_to_vmem [thread:$0]  %s0, 128, %s23, [#allocation3]
    $region5: #{tpu_custom_call.1} parent=1 // pred_fallthru
      _
    // Predicated region
    $region6: #{tpu_custom_call.1} parent=1 // pred_check
      _
    $region7: #{tpu_custom_call.1} parent=1 // pred_check_branch
      %27 = sbr.rel (0) target = $region9
    $region8: #{tpu_custom_call.1} parent=1 // pred_region
      %s29 = ssub.s32 512, 512
      %30 = vsyncadd [#allocation6], %s29
      %s32 = sshll.u32 [#allocation5], 4
      %s33 = int_to_ptr.vmem [resolvable:$true] %s32
      %35 = dma.hbm_to_vmem [thread:$0]  %s1, 512, %s33, [#allocation6]
    $region9: #{tpu_custom_call.1} parent=1 // pred_fallthru
      _
    // Predicated region
    $region10: #{tpu_custom_call.1} parent=1 // pred_check
      _
    $region11: #{tpu_custom_call.1} parent=1 // pred_check_branch
      %37 = sbr.rel (0) target = $region13
    $region12: #{tpu_custom_call.1} parent=1 // pred_region
      _
    $region13: #{tpu_custom_call.1} parent=1 // pred_fallthru
      _
    // Predicated region
    $region14: #{tpu_custom_call.1} parent=1 // pred_check
      _
    $region15: #{tpu_custom_call.1} parent=1 // pred_check_branch
      %39 = sbr.rel (0) target = $region17
    $region16: #{tpu_custom_call.1} parent=1 // pred_region
      %s41 = ssub.s32 24576, 24576
      %42 = vsyncadd [#allocation6], %s41
      %s43 = sshll.u32 [#allocation7], 4
      %s44 = int_to_ptr.vmem [resolvable:$true] %s43
      %49 = dma.hbm_to_vmem [thread:$0]  %s3, 24576, %s44, [#allocation6], 384, 384, 24
    $region17: #{tpu_custom_call.1} parent=1 // pred_fallthru
      _
    // Predicated region
    $region18: #{tpu_custom_call.1} parent=1 // pred_check
      _
    $region19: #{tpu_custom_call.1} parent=1 // pred_check_branch
      %51 = sbr.rel (0) target = $region21
    $region20: #{tpu_custom_call.1} parent=1 // pred_region
      _
    $region21: #{tpu_custom_call.1} parent=1 // pred_fallthru
      _
    // Predicated region
    $region22: #{tpu_custom_call.1} parent=1 // pred_check
      _
    $region23: #{tpu_custom_call.1} parent=1 // pred_check_branch
      %53 = sbr.rel (0) target = $region25
    $region24: #{tpu_custom_call.1} parent=1 // pred_region
      %s55 = ssub.s32 6144, 6144
      %56 = vsyncadd [#allocation9], %s55
      %s57 = sshll.u32 [#allocation8], 4
      %s58 = int_to_ptr.vmem [resolvable:$true] %s57
      %63 = dma.hbm_to_vmem [thread:$0]  %s5, 6144, %s58, [#allocation9], 128, 128, 8
    $region25: #{tpu_custom_call.1} parent=1 // pred_fallthru
      _
    // Predicated region
    $region26: #{tpu_custom_call.1} parent=1 // pred_check
      _
    $region27: #{tpu_custom_call.1} parent=1 // pred_check_branch
      %65 = sbr.rel (0) target = $region29
    $region28: #{tpu_custom_call.1} parent=1 // pred_region
      _
    $region29: #{tpu_custom_call.1} parent=1 // pred_fallthru
      _
    // Predicated region
    $region30: #{tpu_custom_call.1} parent=1 // pred_check
      _
    $region31: #{tpu_custom_call.1} parent=1 // pred_check_branch
      %67 = sbr.rel (0) target = $region33
    $region32: #{tpu_custom_call.1} parent=1 // pred_region
      %68 = dma.done [#allocation3], 128
    $region33: #{tpu_custom_call.1} parent=1 // pred_fallthru
      _
    // Predicated region
    $region34: #{tpu_custom_call.1} parent=1 // pred_check
      _
    $region35: #{tpu_custom_call.1} parent=1 // pred_check_branch
      %70 = sbr.rel (0) target = $region37
    $region36: #{tpu_custom_call.1} parent=1 // pred_region
      %71 = dma.done [#allocation6], 512
    $region37: #{tpu_custom_call.1} parent=1 // pred_fallthru
      _
    // Predicated region
    $region38: #{tpu_custom_call.1} parent=1 // pred_check
      _
    $region39: #{tpu_custom_call.1} parent=1 // pred_check_branch
      %73 = sbr.rel (0) target = $region41
    $region40: #{tpu_custom_call.1} parent=1 // pred_region
      %74 = dma.done [#allocation6], 24576
    $region41: #{tpu_custom_call.1} parent=1 // pred_fallthru
      _
    // Predicated region
    $region42: #{tpu_custom_call.1} parent=1 // pred_check
      _
    $region43: #{tpu_custom_call.1} parent=1 // pred_check_branch
      %76 = sbr.rel (0) target = $region45
    $region44: #{tpu_custom_call.1} parent=1 // pred_region
      %77 = dma.done [#allocation9], 6144
    $region45: #{tpu_custom_call.1} parent=1 // pred_fallthru
      _
    %v78 = vld [vmem:[#allocation2] sm:$0xff]
    %v79 = vld [vmem:[#allocation5] sm:$0xff]
    %v80 = vld [vmem:[#allocation5 + $0x8] sm:$0xff]
    %v81 = vld [vmem:[#allocation5 + $0x10] sm:$0xff]
    %v82 = vld [vmem:[#allocation5 + $0x18] sm:$0xff]
    %v83 = vld [vmem:[%s2] sm:$0xf]
    %v85 = vlaneseq
    %v86 = vshrl.u32 %v85, 7
    %v87 = vsub.s32 0, %v86
    %v88 = vrot.slane %v83, %v87
    %v89 = vlaneseq
    %v90 = vshrl.u32 %v89, 7
    %v91 = vsub.s32 1, %v90
    %v92 = vrot.slane %v83, %v91
    %v93 = vlaneseq
    %v94 = vshrl.u32 %v93, 7
    %v95 = vsub.s32 2, %v94
    %v96 = vrot.slane %v83, %v95
    %v97 = vlaneseq
    %v98 = vshrl.u32 %v97, 7
    %v99 = vsub.s32 3, %v98
    %v100 = vrot.slane %v83, %v99
    %vm105 = vcmask 64512
    %v107 = vsel %vm105, %v78, 0
    %109 = vmatprep.subr.mxu0 %v80
    %110 = vmatpush1.msra.mxu0 %v79
    %111 = vmatprep.subr.mxu0 0.0
    %112 = vmatpush1.msra.mxu0 0.0
    %113 = vmatprep.subr.mxu0 0.0
    %114 = vmatpush1.msra.mxu0 0.0
    %115 = vmatprep.subr.mxu0 0.0
    %116 = vmatpush1.msra.mxu0 0.0
    %117 = vmatprep.subr.mxu0 0.0
    %118 = vmatpush1.msra.mxu0 0.0
    %119 = vmatprep.subr.mxu0 0.0
    %120 = vmatpush1.msra.mxu0 0.0
    %121 = vmatprep.subr.mxu0 0.0
    %122 = vmatpush1.msra.mxu0 0.0
    %123 = vmatprep.subr.mxu0 0.0
    %124 = vmatpush1.msra.mxu0 0.0
    %125 = vmatprep.subr.mxu0 0.0
    %126 = vmatpush1.msra.mxu0 0.0
    %127 = vmatprep.subr.mxu0 0.0
    %128 = vmatpush1.msra.mxu0 0.0
    %129 = vmatprep.subr.mxu0 0.0
    %130 = vmatpush1.msra.mxu0 0.0
    %131 = vmatprep.subr.mxu0 0.0
    %132 = vmatpush1.msra.mxu0 0.0
    %133 = vmatprep.subr.mxu0 0.0
    %134 = vmatpush1.msra.mxu0 0.0
    %135 = vmatprep.subr.mxu0 0.0
    %136 = vmatpush1.msra.mxu0 0.0
    %137 = vmatprep.subr.mxu0 0.0
    %138 = vmatpush1.msra.mxu0 0.0
    %139 = vmatprep.subr.mxu0 0.0
    %140 = vmatpush1.msra.mxu0 0.0
    %141 = vmatprep.subr.mxu0 0.0
    %142 = vmatpush1.msra.mxu0 0.0
    %143 = vmatprep.subr.mxu0 0.0
    %144 = vmatpush1.msra.mxu0 0.0
    %145 = vmatprep.subr.mxu0 0.0
    %146 = vmatpush1.msra.mxu0 0.0
    %147 = vmatprep.subr.mxu0 0.0
    %148 = vmatpush1.msra.mxu0 0.0
    %149 = vmatprep.subr.mxu0 0.0
    %150 = vmatpush1.msra.mxu0 0.0
    %151 = vmatprep.subr.mxu0 0.0
    %152 = vmatpush1.msra.mxu0 0.0
    %153 = vmatprep.subr.mxu0 0.0
    %154 = vmatpush1.msra.mxu0 0.0
    %155 = vmatprep.subr.mxu0 0.0
    %156 = vmatpush1.msra.mxu0 0.0
    %157 = vmatprep.subr.mxu0 0.0
    %158 = vmatpush1.msra.mxu0 0.0
    %159 = vmatprep.subr.mxu0 0.0
    %160 = vmatpush1.msra.mxu0 0.0
    %161 = vmatprep.subr.mxu0 0.0
    %162 = vmatpush1.msra.mxu0 0.0
    %163 = vmatprep.subr.mxu0 0.0
    %164 = vmatpush1.msra.mxu0 0.0
    %165 = vmatprep.subr.mxu0 0.0
    %166 = vmatpush1.msra.mxu0 0.0
    %167 = vmatprep.subr.mxu0 0.0
    %168 = vmatpush1.msra.mxu0 0.0
    %169 = vmatprep.subr.mxu0 0.0
    %170 = vmatpush1.msra.mxu0 0.0
    %171 = vmatprep.subr.mxu0 0.0
    %172 = vmatpush1.msra.mxu0 0.0
    %173 = vmatprep.mubr.f32.mxu0 0.0
    %174 = vmatmul.mubr.f32.gmra.mrb[0].mxu0 %v107
    %v175 = vpop.f32.mrb[0].mxu0
    %v176 = vadd.f32 %v88, %v175
    %v177 = vpop.f32.mrb[0].mxu0
    %v178 = vadd.f32 %v92, %v177
    %179 = vdwg.mxu0
    %180 = vmatprep.subr.mxu0 %v82
    %181 = vmatpush1.msra.mxu0 %v81
    %182 = vmatprep.subr.mxu0 0.0
    %183 = vmatpush1.msra.mxu0 0.0
    %184 = vmatprep.subr.mxu0 0.0
    %185 = vmatpush1.msra.mxu0 0.0
    %186 = vmatprep.subr.mxu0 0.0
    %187 = vmatpush1.msra.mxu0 0.0
    %188 = vmatprep.subr.mxu0 0.0
    %189 = vmatpush1.msra.mxu0 0.0
    %190 = vmatprep.subr.mxu0 0.0
    %191 = vmatpush1.msra.mxu0 0.0
    %192 = vmatprep.subr.mxu0 0.0
    %193 = vmatpush1.msra.mxu0 0.0
    %194 = vmatprep.subr.mxu0 0.0
    %195 = vmatpush1.msra.mxu0 0.0
    %196 = vmatprep.subr.mxu0 0.0
    %197 = vmatpush1.msra.mxu0 0.0
    %198 = vmatprep.subr.mxu0 0.0
    %199 = vmatpush1.msra.mxu0 0.0
    %200 = vmatprep.subr.mxu0 0.0
    %201 = vmatpush1.msra.mxu0 0.0
    %202 = vmatprep.subr.mxu0 0.0
    %203 = vmatpush1.msra.mxu0 0.0
    %204 = vmatprep.subr.mxu0 0.0
    %205 = vmatpush1.msra.mxu0 0.0
    %206 = vmatprep.subr.mxu0 0.0
    %207 = vmatpush1.msra.mxu0 0.0
    %208 = vmatprep.subr.mxu0 0.0
    %209 = vmatpush1.msra.mxu0 0.0
    %210 = vmatprep.subr.mxu0 0.0
    %211 = vmatpush1.msra.mxu0 0.0
    %212 = vmatprep.subr.mxu0 0.0
    %213 = vmatpush1.msra.mxu0 0.0
    %214 = vmatprep.subr.mxu0 0.0
    %215 = vmatpush1.msra.mxu0 0.0
    %216 = vmatprep.subr.mxu0 0.0
    %217 = vmatpush1.msra.mxu0 0.0
    %218 = vmatprep.subr.mxu0 0.0
    %219 = vmatpush1.msra.mxu0 0.0
    %220 = vmatprep.subr.mxu0 0.0
    %221 = vmatpush1.msra.mxu0 0.0
    %222 = vmatprep.subr.mxu0 0.0
    %223 = vmatpush1.msra.mxu0 0.0
    %224 = vmatprep.subr.mxu0 0.0
    %225 = vmatpush1.msra.mxu0 0.0
    %226 = vmatprep.subr.mxu0 0.0
    %227 = vmatpush1.msra.mxu0 0.0
    %228 = vmatprep.subr.mxu0 0.0
    %229 = vmatpush1.msra.mxu0 0.0
    %230 = vmatprep.subr.mxu0 0.0
    %231 = vmatpush1.msra.mxu0 0.0
    %232 = vmatprep.subr.mxu0 0.0
    %233 = vmatpush1.msra.mxu0 0.0
    %234 = vmatprep.subr.mxu0 0.0
    %235 = vmatpush1.msra.mxu0 0.0
    %236 = vmatprep.subr.mxu0 0.0
    %237 = vmatpush1.msra.mxu0 0.0
    %238 = vmatprep.subr.mxu0 0.0
    %239 = vmatpush1.msra.mxu0 0.0
    %240 = vmatprep.subr.mxu0 0.0
    %241 = vmatpush1.msra.mxu0 0.0
    %242 = vmatprep.subr.mxu0 0.0
    %243 = vmatpush1.msra.mxu0 0.0
    %244 = vmatprep.mubr.f32.mxu0 0.0
    %245 = vmatmul.mubr.f32.gmra.mrb[0].mxu0 %v107
    %v246 = vpop.f32.mrb[0].mxu0
    %v247 = vadd.f32 %v96, %v246
    %v248 = vpop.f32.mrb[0].mxu0
    %v249 = vadd.f32 %v100, %v248
    %250 = vdwg.mxu0
    %v251 = vmax.f32 %v176, 0.0
    %v252 = vmax.f32 %v178, 0.0
    %v253 = vmax.f32 %v247, 0.0
    %v254 = vmax.f32 %v249, 0.0
    %v255 = vld [vmem:[#allocation7] sm:$0xff]
    %v256 = vld [vmem:[#allocation7 + $0x8] sm:$0xff]
    %v257 = vld [vmem:[#allocation7 + $0x10] sm:$0xff]
    %v258 = vld [vmem:[#allocation7 + $0x18] sm:$0xff]
    %v259 = vld [vmem:[#allocation7 + $0x20] sm:$0xff]
    %v260 = vld [vmem:[#allocation7 + $0x28] sm:$0xff]
    %v261 = vld [vmem:[#allocation7 + $0x30] sm:$0xff]
    %v262 = vld [vmem:[#allocation7 + $0x38] sm:$0xff]
    %v263 = vld [vmem:[#allocation7 + $0x40] sm:$0xff]
    %v264 = vld [vmem:[#allocation7 + $0x48] sm:$0xff]
    %v265 = vld [vmem:[#allocation7 + $0x50] sm:$0xff]
    %v266 = vld [vmem:[#allocation7 + $0x58] sm:$0xff]
    %v267 = vld [vmem:[#allocation7 + $0x60] sm:$0xff]
    %v268 = vld [vmem:[#allocation7 + $0x68] sm:$0xff]
    %v269 = vld [vmem:[#allocation7 + $0x70] sm:$0xff]
    %v270 = vld [vmem:[#allocation7 + $0x78] sm:$0xff]
    %v271 = vld [vmem:[#allocation7 + $0x80] sm:$0xff]
    %v272 = vld [vmem:[#allocation7 + $0x88] sm:$0xff]
    %v273 = vld [vmem:[#allocation7 + $0x90] sm:$0xff]
    %v274 = vld [vmem:[#allocation7 + $0x98] sm:$0xff]
    %v275 = vld [vmem:[#allocation7 + $0xa0] sm:$0xff]
    %v276 = vld [vmem:[#allocation7 + $0xa8] sm:$0xff]
    %v277 = vld [vmem:[#allocation7 + $0xb0] sm:$0xff]
    %v278 = vld [vmem:[#allocation7 + $0xb8] sm:$0xff]
    %v279 = vld [vmem:[#allocation7 + $0xc0] sm:$0xff]
    %v280 = vld [vmem:[#allocation7 + $0xc8] sm:$0xff]
    %v281 = vld [vmem:[#allocation7 + $0xd0] sm:$0xff]
    %v282 = vld [vmem:[#allocation7 + $0xd8] sm:$0xff]
    %v283 = vld [vmem:[#allocation7 + $0xe0] sm:$0xff]
    %v284 = vld [vmem:[#allocation7 + $0xe8] sm:$0xff]
    %v285 = vld [vmem:[#allocation7 + $0xf0] sm:$0xff]
    %v286 = vld [vmem:[#allocation7 + $0xf8] sm:$0xff]
    %v287 = vld [vmem:[#allocation7 + $0x100] sm:$0xff]
    %v288 = vld [vmem:[#allocation7 + $0x108] sm:$0xff]
    %v289 = vld [vmem:[#allocation7 + $0x110] sm:$0xff]
    %v290 = vld [vmem:[#allocation7 + $0x118] sm:$0xff]
    %v291 = vld [vmem:[#allocation7 + $0x120] sm:$0xff]
    %v292 = vld [vmem:[#allocation7 + $0x128] sm:$0xff]
    %v293 = vld [vmem:[#allocation7 + $0x130] sm:$0xff]
    %v294 = vld [vmem:[#allocation7 + $0x138] sm:$0xff]
    %v295 = vld [vmem:[#allocation7 + $0x140] sm:$0xff]
    %v296 = vld [vmem:[#allocation7 + $0x148] sm:$0xff]
    %v297 = vld [vmem:[#allocation7 + $0x150] sm:$0xff]
    %v298 = vld [vmem:[#allocation7 + $0x158] sm:$0xff]
    %v299 = vld [vmem:[#allocation7 + $0x160] sm:$0xff]
    %v300 = vld [vmem:[#allocation7 + $0x168] sm:$0xff]
    %v301 = vld [vmem:[#allocation7 + $0x170] sm:$0xff]
    %v302 = vld [vmem:[#allocation7 + $0x178] sm:$0xff]
    %v303 = vld [vmem:[#allocation7 + $0x180] sm:$0xff]
    %v304 = vld [vmem:[#allocation7 + $0x188] sm:$0xff]
    %v305 = vld [vmem:[#allocation7 + $0x190] sm:$0xff]
    %v306 = vld [vmem:[#allocation7 + $0x198] sm:$0xff]
    %v307 = vld [vmem:[#allocation7 + $0x1a0] sm:$0xff]
    %v308 = vld [vmem:[#allocation7 + $0x1a8] sm:$0xff]
    %v309 = vld [vmem:[#allocation7 + $0x1b0] sm:$0xff]
    %v310 = vld [vmem:[#allocation7 + $0x1b8] sm:$0xff]
    %v311 = vld [vmem:[#allocation7 + $0x1c0] sm:$0xff]
    %v312 = vld [vmem:[#allocation7 + $0x1c8] sm:$0xff]
    %v313 = vld [vmem:[#allocation7 + $0x1d0] sm:$0xff]
    %v314 = vld [vmem:[#allocation7 + $0x1d8] sm:$0xff]
    %v315 = vld [vmem:[#allocation7 + $0x1e0] sm:$0xff]
    %v316 = vld [vmem:[#allocation7 + $0x1e8] sm:$0xff]
    %v317 = vld [vmem:[#allocation7 + $0x1f0] sm:$0xff]
    %v318 = vld [vmem:[#allocation7 + $0x1f8] sm:$0xff]
    %v319 = vld [vmem:[#allocation7 + $0x200] sm:$0xff]
    %v320 = vld [vmem:[#allocation7 + $0x208] sm:$0xff]
    %v321 = vld [vmem:[#allocation7 + $0x210] sm:$0xff]
    %v322 = vld [vmem:[#allocation7 + $0x218] sm:$0xff]
    %v323 = vld [vmem:[#allocation7 + $0x220] sm:$0xff]
    %v324 = vld [vmem:[#allocation7 + $0x228] sm:$0xff]
    %v325 = vld [vmem:[#allocation7 + $0x230] sm:$0xff]
    %v326 = vld [vmem:[#allocation7 + $0x238] sm:$0xff]
    %v327 = vld [vmem:[#allocation7 + $0x240] sm:$0xff]
    %v328 = vld [vmem:[#allocation7 + $0x248] sm:$0xff]
    %v329 = vld [vmem:[#allocation7 + $0x250] sm:$0xff]
    %v330 = vld [vmem:[#allocation7 + $0x258] sm:$0xff]
    %v331 = vld [vmem:[#allocation7 + $0x260] sm:$0xff]
    %v332 = vld [vmem:[#allocation7 + $0x268] sm:$0xff]
    %v333 = vld [vmem:[#allocation7 + $0x270] sm:$0xff]
    %v334 = vld [vmem:[#allocation7 + $0x278] sm:$0xff]
    %v335 = vld [vmem:[#allocation7 + $0x280] sm:$0xff]
    %v336 = vld [vmem:[#allocation7 + $0x288] sm:$0xff]
    %v337 = vld [vmem:[#allocation7 + $0x290] sm:$0xff]
    %v338 = vld [vmem:[#allocation7 + $0x298] sm:$0xff]
    %v339 = vld [vmem:[#allocation7 + $0x2a0] sm:$0xff]
    %v340 = vld [vmem:[#allocation7 + $0x2a8] sm:$0xff]
    %v341 = vld [vmem:[#allocation7 + $0x2b0] sm:$0xff]
    %v342 = vld [vmem:[#allocation7 + $0x2b8] sm:$0xff]
    %v343 = vld [vmem:[#allocation7 + $0x2c0] sm:$0xff]
    %v344 = vld [vmem:[#allocation7 + $0x2c8] sm:$0xff]
    %v345 = vld [vmem:[#allocation7 + $0x2d0] sm:$0xff]
    %v346 = vld [vmem:[#allocation7 + $0x2d8] sm:$0xff]
    %v347 = vld [vmem:[#allocation7 + $0x2e0] sm:$0xff]
    %v348 = vld [vmem:[#allocation7 + $0x2e8] sm:$0xff]
    %v349 = vld [vmem:[#allocation7 + $0x2f0] sm:$0xff]
    %v350 = vld [vmem:[#allocation7 + $0x2f8] sm:$0xff]
    %v351 = vld [vmem:[#allocation7 + $0x300] sm:$0xff]
    %v352 = vld [vmem:[#allocation7 + $0x308] sm:$0xff]
    %v353 = vld [vmem:[#allocation7 + $0x310] sm:$0xff]
    %v354 = vld [vmem:[#allocation7 + $0x318] sm:$0xff]
    %v355 = vld [vmem:[#allocation7 + $0x320] sm:$0xff]
    %v356 = vld [vmem:[#allocation7 + $0x328] sm:$0xff]
    %v357 = vld [vmem:[#allocation7 + $0x330] sm:$0xff]
    %v358 = vld [vmem:[#allocation7 + $0x338] sm:$0xff]
    %v359 = vld [vmem:[#allocation7 + $0x340] sm:$0xff]
    %v360 = vld [vmem:[#allocation7 + $0x348] sm:$0xff]
    %v361 = vld [vmem:[#allocation7 + $0x350] sm:$0xff]
    %v362 = vld [vmem:[#allocation7 + $0x358] sm:$0xff]
    %v363 = vld [vmem:[#allocation7 + $0x360] sm:$0xff]
    %v364 = vld [vmem:[#allocation7 + $0x368] sm:$0xff]
    %v365 = vld [vmem:[#allocation7 + $0x370] sm:$0xff]
    %v366 = vld [vmem:[#allocation7 + $0x378] sm:$0xff]
    %v367 = vld [vmem:[#allocation7 + $0x380] sm:$0xff]
    %v368 = vld [vmem:[#allocation7 + $0x388] sm:$0xff]
    %v369 = vld [vmem:[#allocation7 + $0x390] sm:$0xff]
    %v370 = vld [vmem:[#allocation7 + $0x398] sm:$0xff]
    %v371 = vld [vmem:[#allocation7 + $0x3a0] sm:$0xff]
    %v372 = vld [vmem:[#allocation7 + $0x3a8] sm:$0xff]
    %v373 = vld [vmem:[#allocation7 + $0x3b0] sm:$0xff]
    %v374 = vld [vmem:[#allocation7 + $0x3b8] sm:$0xff]
    %v375 = vld [vmem:[#allocation7 + $0x3c0] sm:$0xff]
    %v376 = vld [vmem:[#allocation7 + $0x3c8] sm:$0xff]
    %v377 = vld [vmem:[#allocation7 + $0x3d0] sm:$0xff]
    %v378 = vld [vmem:[#allocation7 + $0x3d8] sm:$0xff]
    %v379 = vld [vmem:[#allocation7 + $0x3e0] sm:$0xff]
    %v380 = vld [vmem:[#allocation7 + $0x3e8] sm:$0xff]
    %v381 = vld [vmem:[#allocation7 + $0x3f0] sm:$0xff]
    %v382 = vld [vmem:[#allocation7 + $0x3f8] sm:$0xff]
    %v383 = vld [vmem:[#allocation7 + $0x400] sm:$0xff]
    %v384 = vld [vmem:[#allocation7 + $0x408] sm:$0xff]
    %v385 = vld [vmem:[#allocation7 + $0x410] sm:$0xff]
    %v386 = vld [vmem:[#allocation7 + $0x418] sm:$0xff]
    %v387 = vld [vmem:[#allocation7 + $0x420] sm:$0xff]
    %v388 = vld [vmem:[#allocation7 + $0x428] sm:$0xff]
    %v389 = vld [vmem:[#allocation7 + $0x430] sm:$0xff]
    %v390 = vld [vmem:[#allocation7 + $0x438] sm:$0xff]
    %v391 = vld [vmem:[#allocation7 + $0x440] sm:$0xff]
    %v392 = vld [vmem:[#allocation7 + $0x448] sm:$0xff]
    %v393 = vld [vmem:[#allocation7 + $0x450] sm:$0xff]
    %v394 = vld [vmem:[#allocation7 + $0x458] sm:$0xff]
    %v395 = vld [vmem:[#allocation7 + $0x460] sm:$0xff]
    %v396 = vld [vmem:[#allocation7 + $0x468] sm:$0xff]
    %v397 = vld [vmem:[#allocation7 + $0x470] sm:$0xff]
    %v398 = vld [vmem:[#allocation7 + $0x478] sm:$0xff]
    %v399 = vld [vmem:[#allocation7 + $0x480] sm:$0xff]
    %v400 = vld [vmem:[#allocation7 + $0x488] sm:$0xff]
    %v401 = vld [vmem:[#allocation7 + $0x490] sm:$0xff]
    %v402 = vld [vmem:[#allocation7 + $0x498] sm:$0xff]
    %v403 = vld [vmem:[#allocation7 + $0x4a0] sm:$0xff]
    %v404 = vld [vmem:[#allocation7 + $0x4a8] sm:$0xff]
    %v405 = vld [vmem:[#allocation7 + $0x4b0] sm:$0xff]
    %v406 = vld [vmem:[#allocation7 + $0x4b8] sm:$0xff]
    %v407 = vld [vmem:[#allocation7 + $0x4c0] sm:$0xff]
    %v408 = vld [vmem:[#allocation7 + $0x4c8] sm:$0xff]
    %v409 = vld [vmem:[#allocation7 + $0x4d0] sm:$0xff]
    %v410 = vld [vmem:[#allocation7 + $0x4d8] sm:$0xff]
    %v411 = vld [vmem:[#allocation7 + $0x4e0] sm:$0xff]
    %v412 = vld [vmem:[#allocation7 + $0x4e8] sm:$0xff]
    %v413 = vld [vmem:[#allocation7 + $0x4f0] sm:$0xff]
    %v414 = vld [vmem:[#allocation7 + $0x4f8] sm:$0xff]
    %v415 = vld [vmem:[#allocation7 + $0x500] sm:$0xff]
    %v416 = vld [vmem:[#allocation7 + $0x508] sm:$0xff]
    %v417 = vld [vmem:[#allocation7 + $0x510] sm:$0xff]
    %v418 = vld [vmem:[#allocation7 + $0x518] sm:$0xff]
    %v419 = vld [vmem:[#allocation7 + $0x520] sm:$0xff]
    %v420 = vld [vmem:[#allocation7 + $0x528] sm:$0xff]
    %v421 = vld [vmem:[#allocation7 + $0x530] sm:$0xff]
    %v422 = vld [vmem:[#allocation7 + $0x538] sm:$0xff]
    %v423 = vld [vmem:[#allocation7 + $0x540] sm:$0xff]
    %v424 = vld [vmem:[#allocation7 + $0x548] sm:$0xff]
    %v425 = vld [vmem:[#allocation7 + $0x550] sm:$0xff]
    %v426 = vld [vmem:[#allocation7 + $0x558] sm:$0xff]
    %v427 = vld [vmem:[#allocation7 + $0x560] sm:$0xff]
    %v428 = vld [vmem:[#allocation7 + $0x568] sm:$0xff]
    %v429 = vld [vmem:[#allocation7 + $0x570] sm:$0xff]
    %v430 = vld [vmem:[#allocation7 + $0x578] sm:$0xff]
    %v431 = vld [vmem:[#allocation7 + $0x580] sm:$0xff]
    %v432 = vld [vmem:[#allocation7 + $0x588] sm:$0xff]
    %v433 = vld [vmem:[#allocation7 + $0x590] sm:$0xff]
    %v434 = vld [vmem:[#allocation7 + $0x598] sm:$0xff]
    %v435 = vld [vmem:[#allocation7 + $0x5a0] sm:$0xff]
    %v436 = vld [vmem:[#allocation7 + $0x5a8] sm:$0xff]
    %v437 = vld [vmem:[#allocation7 + $0x5b0] sm:$0xff]
    %v438 = vld [vmem:[#allocation7 + $0x5b8] sm:$0xff]
    %v439 = vld [vmem:[#allocation7 + $0x5c0] sm:$0xff]
    %v440 = vld [vmem:[#allocation7 + $0x5c8] sm:$0xff]
    %v441 = vld [vmem:[#allocation7 + $0x5d0] sm:$0xff]
    %v442 = vld [vmem:[#allocation7 + $0x5d8] sm:$0xff]
    %v443 = vld [vmem:[#allocation7 + $0x5e0] sm:$0xff]
    %v444 = vld [vmem:[#allocation7 + $0x5e8] sm:$0xff]
    %v445 = vld [vmem:[#allocation7 + $0x5f0] sm:$0xff]
    %v446 = vld [vmem:[#allocation7 + $0x5f8] sm:$0xff]
    %v447 = vld [vmem:[%s4] sm:$0x7]
    %v449 = vlaneseq
    %v450 = vshrl.u32 %v449, 7
    %v451 = vsub.s32 0, %v450
    %v452 = vrot.slane %v447, %v451
    %v453 = vlaneseq
    %v454 = vshrl.u32 %v453, 7
    %v455 = vsub.s32 1, %v454
    %v456 = vrot.slane %v447, %v455
    %v457 = vlaneseq
    %v458 = vshrl.u32 %v457, 7
    %v459 = vsub.s32 2, %v458
    %v460 = vrot.slane %v447, %v459
    %464 = vmatprep.subr.mxu0 %v256
    %465 = vmatpush1.msra.mxu0 %v255
    %466 = vmatprep.subr.mxu0 %v259
    %467 = vmatpush1.msra.mxu0 %v258
    %468 = vmatprep.subr.mxu0 %v262
    %469 = vmatpush1.msra.mxu0 %v261
    %470 = vmatprep.subr.mxu0 %v265
    %471 = vmatpush1.msra.mxu0 %v264
    %472 = vmatprep.subr.mxu0 %v268
    %473 = vmatpush1.msra.mxu0 %v267
    %474 = vmatprep.subr.mxu0 %v271
    %475 = vmatpush1.msra.mxu0 %v270
    %476 = vmatprep.subr.mxu0 %v274
    %477 = vmatpush1.msra.mxu0 %v273
    %478 = vmatprep.subr.mxu0 %v277
    %479 = vmatpush1.msra.mxu0 %v276
    %480 = vmatprep.subr.mxu0 %v280
    %481 = vmatpush1.msra.mxu0 %v279
    %482 = vmatprep.subr.mxu0 %v283
    %483 = vmatpush1.msra.mxu0 %v282
    %484 = vmatprep.subr.mxu0 %v286
    %485 = vmatpush1.msra.mxu0 %v285
    %486 = vmatprep.subr.mxu0 %v289
    %487 = vmatpush1.msra.mxu0 %v288
    %488 = vmatprep.subr.mxu0 %v292
    %489 = vmatpush1.msra.mxu0 %v291
    %490 = vmatprep.subr.mxu0 %v295
    %491 = vmatpush1.msra.mxu0 %v294
    %492 = vmatprep.subr.mxu0 %v298
    %493 = vmatpush1.msra.mxu0 %v297
    %494 = vmatprep.subr.mxu0 %v301
    %495 = vmatpush1.msra.mxu0 %v300
    %496 = vmatprep.subr.mxu0 %v304
    %497 = vmatpush1.msra.mxu0 %v303
    %498 = vmatprep.subr.mxu0 %v307
    %499 = vmatpush1.msra.mxu0 %v306
    %500 = vmatprep.subr.mxu0 %v310
    %501 = vmatpush1.msra.mxu0 %v309
    %502 = vmatprep.subr.mxu0 %v313
    %503 = vmatpush1.msra.mxu0 %v312
    %504 = vmatprep.subr.mxu0 %v316
    %505 = vmatpush1.msra.mxu0 %v315
    %506 = vmatprep.subr.mxu0 %v319
    %507 = vmatpush1.msra.mxu0 %v318
    %508 = vmatprep.subr.mxu0 %v322
    %509 = vmatpush1.msra.mxu0 %v321
    %510 = vmatprep.subr.mxu0 %v325
    %511 = vmatpush1.msra.mxu0 %v324
    %512 = vmatprep.subr.mxu0 %v328
    %513 = vmatpush1.msra.mxu0 %v327
    %514 = vmatprep.subr.mxu0 %v331
    %515 = vmatpush1.msra.mxu0 %v330
    %516 = vmatprep.subr.mxu0 %v334
    %517 = vmatpush1.msra.mxu0 %v333
    %518 = vmatprep.subr.mxu0 %v337
    %519 = vmatpush1.msra.mxu0 %v336
    %520 = vmatprep.subr.mxu0 %v340
    %521 = vmatpush1.msra.mxu0 %v339
    %522 = vmatprep.subr.mxu0 %v343
    %523 = vmatpush1.msra.mxu0 %v342
    %524 = vmatprep.subr.mxu0 %v346
    %525 = vmatpush1.msra.mxu0 %v345
    %526 = vmatprep.subr.mxu0 %v349
    %527 = vmatpush1.msra.mxu0 %v348
    %528 = vmatprep.mubr.f32.mxu0 %v252
    %529 = vmatmul.mubr.f32.gmra.mrb[0].mxu0 %v251
    %v530 = vpop.f32.mrb[0].mxu0
    %v531 = vadd.f32 %v452, %v530
    %v532 = vpop.f32.mrb[0].mxu0
    %v533 = vadd.f32 %v456, %v532
    %534 = vdwg.mxu0
    %535 = vmatprep.subr.mxu0 %v352
    %536 = vmatpush1.msra.mxu0 %v351
    %537 = vmatprep.subr.mxu0 %v355
    %538 = vmatpush1.msra.mxu0 %v354
    %539 = vmatprep.subr.mxu0 %v358
    %540 = vmatpush1.msra.mxu0 %v357
    %541 = vmatprep.subr.mxu0 %v361
    %542 = vmatpush1.msra.mxu0 %v360
    %543 = vmatprep.subr.mxu0 %v364
    %544 = vmatpush1.msra.mxu0 %v363
    %545 = vmatprep.subr.mxu0 %v367
    %546 = vmatpush1.msra.mxu0 %v366
    %547 = vmatprep.subr.mxu0 %v370
    %548 = vmatpush1.msra.mxu0 %v369
    %549 = vmatprep.subr.mxu0 %v373
    %550 = vmatpush1.msra.mxu0 %v372
    %551 = vmatprep.subr.mxu0 %v376
    %552 = vmatpush1.msra.mxu0 %v375
    %553 = vmatprep.subr.mxu0 %v379
    %554 = vmatpush1.msra.mxu0 %v378
    %555 = vmatprep.subr.mxu0 %v382
    %556 = vmatpush1.msra.mxu0 %v381
    %557 = vmatprep.subr.mxu0 %v385
    %558 = vmatpush1.msra.mxu0 %v384
    %559 = vmatprep.subr.mxu0 %v388
    %560 = vmatpush1.msra.mxu0 %v387
    %561 = vmatprep.subr.mxu0 %v391
    %562 = vmatpush1.msra.mxu0 %v390
    %563 = vmatprep.subr.mxu0 %v394
    %564 = vmatpush1.msra.mxu0 %v393
    %565 = vmatprep.subr.mxu0 %v397
    %566 = vmatpush1.msra.mxu0 %v396
    %567 = vmatprep.subr.mxu0 %v400
    %568 = vmatpush1.msra.mxu0 %v399
    %569 = vmatprep.subr.mxu0 %v403
    %570 = vmatpush1.msra.mxu0 %v402
    %571 = vmatprep.subr.mxu0 %v406
    %572 = vmatpush1.msra.mxu0 %v405
    %573 = vmatprep.subr.mxu0 %v409
    %574 = vmatpush1.msra.mxu0 %v408
    %575 = vmatprep.subr.mxu0 %v412
    %576 = vmatpush1.msra.mxu0 %v411
    %577 = vmatprep.subr.mxu0 %v415
    %578 = vmatpush1.msra.mxu0 %v414
    %579 = vmatprep.subr.mxu0 %v418
    %580 = vmatpush1.msra.mxu0 %v417
    %581 = vmatprep.subr.mxu0 %v421
    %582 = vmatpush1.msra.mxu0 %v420
    %583 = vmatprep.subr.mxu0 %v424
    %584 = vmatpush1.msra.mxu0 %v423
    %585 = vmatprep.subr.mxu0 %v427
    %586 = vmatpush1.msra.mxu0 %v426
    %587 = vmatprep.subr.mxu0 %v430
    %588 = vmatpush1.msra.mxu0 %v429
    %589 = vmatprep.subr.mxu0 %v433
    %590 = vmatpush1.msra.mxu0 %v432
    %591 = vmatprep.subr.mxu0 %v436
    %592 = vmatpush1.msra.mxu0 %v435
    %593 = vmatprep.subr.mxu0 %v439
    %594 = vmatpush1.msra.mxu0 %v438
    %595 = vmatprep.subr.mxu0 %v442
    %596 = vmatpush1.msra.mxu0 %v441
    %597 = vmatprep.subr.mxu0 %v445
    %598 = vmatpush1.msra.mxu0 %v444
    %599 = vmatprep.mubr.f32.mxu0 %v254
    %600 = vmatmul.mubr.f32.gmra.mrb[0].mxu0 %v253
    %v601 = vpop.f32.mrb[0].mxu0
    %v602 = vadd.f32 %v531, %v601
    %v603 = vpop.f32.mrb[0].mxu0
    %v604 = vadd.f32 %v533, %v603
    %605 = vdwg.mxu0
    %606 = vmatprep.subr.mxu0 0.0
    %607 = vmatpush1.msra.mxu0 %v257
    %608 = vmatprep.subr.mxu0 0.0
    %609 = vmatpush1.msra.mxu0 %v260
    %610 = vmatprep.subr.mxu0 0.0
    %611 = vmatpush1.msra.mxu0 %v263
    %612 = vmatprep.subr.mxu0 0.0
    %613 = vmatpush1.msra.mxu0 %v266
    %614 = vmatprep.subr.mxu0 0.0
    %615 = vmatpush1.msra.mxu0 %v269
    %616 = vmatprep.subr.mxu0 0.0
    %617 = vmatpush1.msra.mxu0 %v272
    %618 = vmatprep.subr.mxu0 0.0
    %619 = vmatpush1.msra.mxu0 %v275
    %620 = vmatprep.subr.mxu0 0.0
    %621 = vmatpush1.msra.mxu0 %v278
    %622 = vmatprep.subr.mxu0 0.0
    %623 = vmatpush1.msra.mxu0 %v281
    %624 = vmatprep.subr.mxu0 0.0
    %625 = vmatpush1.msra.mxu0 %v284
    %626 = vmatprep.subr.mxu0 0.0
    %627 = vmatpush1.msra.mxu0 %v287
    %628 = vmatprep.subr.mxu0 0.0
    %629 = vmatpush1.msra.mxu0 %v290
    %630 = vmatprep.subr.mxu0 0.0
    %631 = vmatpush1.msra.mxu0 %v293
    %632 = vmatprep.subr.mxu0 0.0
    %633 = vmatpush1.msra.mxu0 %v296
    %634 = vmatprep.subr.mxu0 0.0
    %635 = vmatpush1.msra.mxu0 %v299
    %636 = vmatprep.subr.mxu0 0.0
    %637 = vmatpush1.msra.mxu0 %v302
    %638 = vmatprep.subr.mxu0 0.0
    %639 = vmatpush1.msra.mxu0 %v305
    %640 = vmatprep.subr.mxu0 0.0
    %641 = vmatpush1.msra.mxu0 %v308
    %642 = vmatprep.subr.mxu0 0.0
    %643 = vmatpush1.msra.mxu0 %v311
    %644 = vmatprep.subr.mxu0 0.0
    %645 = vmatpush1.msra.mxu0 %v314
    %646 = vmatprep.subr.mxu0 0.0
    %647 = vmatpush1.msra.mxu0 %v317
    %648 = vmatprep.subr.mxu0 0.0
    %649 = vmatpush1.msra.mxu0 %v320
    %650 = vmatprep.subr.mxu0 0.0
    %651 = vmatpush1.msra.mxu0 %v323
    %652 = vmatprep.subr.mxu0 0.0
    %653 = vmatpush1.msra.mxu0 %v326
    %654 = vmatprep.subr.mxu0 0.0
    %655 = vmatpush1.msra.mxu0 %v329
    %656 = vmatprep.subr.mxu0 0.0
    %657 = vmatpush1.msra.mxu0 %v332
    %658 = vmatprep.subr.mxu0 0.0
    %659 = vmatpush1.msra.mxu0 %v335
    %660 = vmatprep.subr.mxu0 0.0
    %661 = vmatpush1.msra.mxu0 %v338
    %662 = vmatprep.subr.mxu0 0.0
    %663 = vmatpush1.msra.mxu0 %v341
    %664 = vmatprep.subr.mxu0 0.0
    %665 = vmatpush1.msra.mxu0 %v344
    %666 = vmatprep.subr.mxu0 0.0
    %667 = vmatpush1.msra.mxu0 %v347
    %668 = vmatprep.subr.mxu0 0.0
    %669 = vmatpush1.msra.mxu0 %v350
    %670 = vmatprep.mubr.f32.mxu0 %v252
    %671 = vmatmul.mubr.f32.gmra.mrb[0].mxu0 %v251
    %v672 = vpop.f32.mrb[0].mxu0
    %v673 = vadd.f32 %v460, %v672
    %v674 = vpop.f32.mrb[0].mxu0
    %675 = vdwg.mxu0
    %676 = vmatprep.subr.mxu0 0.0
    %677 = vmatpush1.msra.mxu0 %v353
    %678 = vmatprep.subr.mxu0 0.0
    %679 = vmatpush1.msra.mxu0 %v356
    %680 = vmatprep.subr.mxu0 0.0
    %681 = vmatpush1.msra.mxu0 %v359
    %682 = vmatprep.subr.mxu0 0.0
    %683 = vmatpush1.msra.mxu0 %v362
    %684 = vmatprep.subr.mxu0 0.0
    %685 = vmatpush1.msra.mxu0 %v365
    %686 = vmatprep.subr.mxu0 0.0
    %687 = vmatpush1.msra.mxu0 %v368
    %688 = vmatprep.subr.mxu0 0.0
    %689 = vmatpush1.msra.mxu0 %v371
    %690 = vmatprep.subr.mxu0 0.0
    %691 = vmatpush1.msra.mxu0 %v374
    %692 = vmatprep.subr.mxu0 0.0
    %693 = vmatpush1.msra.mxu0 %v377
    %694 = vmatprep.subr.mxu0 0.0
    %695 = vmatpush1.msra.mxu0 %v380
    %696 = vmatprep.subr.mxu0 0.0
    %697 = vmatpush1.msra.mxu0 %v383
    %698 = vmatprep.subr.mxu0 0.0
    %699 = vmatpush1.msra.mxu0 %v386
    %700 = vmatprep.subr.mxu0 0.0
    %701 = vmatpush1.msra.mxu0 %v389
    %702 = vmatprep.subr.mxu0 0.0
    %703 = vmatpush1.msra.mxu0 %v392
    %704 = vmatprep.subr.mxu0 0.0
    %705 = vmatpush1.msra.mxu0 %v395
    %706 = vmatprep.subr.mxu0 0.0
    %707 = vmatpush1.msra.mxu0 %v398
    %708 = vmatprep.subr.mxu0 0.0
    %709 = vmatpush1.msra.mxu0 %v401
    %710 = vmatprep.subr.mxu0 0.0
    %711 = vmatpush1.msra.mxu0 %v404
    %712 = vmatprep.subr.mxu0 0.0
    %713 = vmatpush1.msra.mxu0 %v407
    %714 = vmatprep.subr.mxu0 0.0
    %715 = vmatpush1.msra.mxu0 %v410
    %716 = vmatprep.subr.mxu0 0.0
    %717 = vmatpush1.msra.mxu0 %v413
    %718 = vmatprep.subr.mxu0 0.0
    %719 = vmatpush1.msra.mxu0 %v416
    %720 = vmatprep.subr.mxu0 0.0
    %721 = vmatpush1.msra.mxu0 %v419
    %722 = vmatprep.subr.mxu0 0.0
    %723 = vmatpush1.msra.mxu0 %v422
    %724 = vmatprep.subr.mxu0 0.0
    %725 = vmatpush1.msra.mxu0 %v425
    %726 = vmatprep.subr.mxu0 0.0
    %727 = vmatpush1.msra.mxu0 %v428
    %728 = vmatprep.subr.mxu0 0.0
    %729 = vmatpush1.msra.mxu0 %v431
    %730 = vmatprep.subr.mxu0 0.0
    %731 = vmatpush1.msra.mxu0 %v434
    %732 = vmatprep.subr.mxu0 0.0
    %733 = vmatpush1.msra.mxu0 %v437
    %734 = vmatprep.subr.mxu0 0.0
    %735 = vmatpush1.msra.mxu0 %v440
    %736 = vmatprep.subr.mxu0 0.0
    %737 = vmatpush1.msra.mxu0 %v443
    %738 = vmatprep.subr.mxu0 0.0
    %739 = vmatpush1.msra.mxu0 %v446
    %740 = vmatprep.mubr.f32.mxu0 %v254
    %741 = vmatmul.mubr.f32.gmra.mrb[0].mxu0 %v253
    %v742 = vpop.f32.mrb[0].mxu0
    %v743 = vadd.f32 %v673, %v742
    %v744 = vpop.f32.mrb[0].mxu0
    %745 = vdwg.mxu0
    %v746 = vmax.f32 %v602, 0.0
    %v747 = vmax.f32 %v604, 0.0
    %v748 = vmax.f32 %v743, 0.0
    %v749 = vld [vmem:[#allocation8] sm:$0xff]
    %v750 = vld [vmem:[#allocation8 + $0x8] sm:$0xff]
    %v751 = vld [vmem:[#allocation8 + $0x10] sm:$0xff]
    %v752 = vld [vmem:[#allocation8 + $0x18] sm:$0xff]
    %v753 = vld [vmem:[#allocation8 + $0x20] sm:$0xff]
    %v754 = vld [vmem:[#allocation8 + $0x28] sm:$0xff]
    %v755 = vld [vmem:[#allocation8 + $0x30] sm:$0xff]
    %v756 = vld [vmem:[#allocation8 + $0x38] sm:$0xff]
    %v757 = vld [vmem:[#allocation8 + $0x40] sm:$0xff]
    %v758 = vld [vmem:[#allocation8 + $0x48] sm:$0xff]
    %v759 = vld [vmem:[#allocation8 + $0x50] sm:$0xff]
    %v760 = vld [vmem:[#allocation8 + $0x58] sm:$0xff]
    %v761 = vld [vmem:[#allocation8 + $0x60] sm:$0xff]
    %v762 = vld [vmem:[#allocation8 + $0x68] sm:$0xff]
    %v763 = vld [vmem:[#allocation8 + $0x70] sm:$0xff]
    %v764 = vld [vmem:[#allocation8 + $0x78] sm:$0xff]
    %v765 = vld [vmem:[#allocation8 + $0x80] sm:$0xff]
    %v766 = vld [vmem:[#allocation8 + $0x88] sm:$0xff]
    %v767 = vld [vmem:[#allocation8 + $0x90] sm:$0xff]
    %v768 = vld [vmem:[#allocation8 + $0x98] sm:$0xff]
    %v769 = vld [vmem:[#allocation8 + $0xa0] sm:$0xff]
    %v770 = vld [vmem:[#allocation8 + $0xa8] sm:$0xff]
    %v771 = vld [vmem:[#allocation8 + $0xb0] sm:$0xff]
    %v772 = vld [vmem:[#allocation8 + $0xb8] sm:$0xff]
    %v773 = vld [vmem:[#allocation8 + $0xc0] sm:$0xff]
    %v774 = vld [vmem:[#allocation8 + $0xc8] sm:$0xff]
    %v775 = vld [vmem:[#allocation8 + $0xd0] sm:$0xff]
    %v776 = vld [vmem:[#allocation8 + $0xd8] sm:$0xff]
    %v777 = vld [vmem:[#allocation8 + $0xe0] sm:$0xff]
    %v778 = vld [vmem:[#allocation8 + $0xe8] sm:$0xff]
    %v779 = vld [vmem:[#allocation8 + $0xf0] sm:$0xff]
    %v780 = vld [vmem:[#allocation8 + $0xf8] sm:$0xff]
    %v781 = vld [vmem:[#allocation8 + $0x100] sm:$0xff]
    %v782 = vld [vmem:[#allocation8 + $0x108] sm:$0xff]
    %v783 = vld [vmem:[#allocation8 + $0x110] sm:$0xff]
    %v784 = vld [vmem:[#allocation8 + $0x118] sm:$0xff]
    %v785 = vld [vmem:[#allocation8 + $0x120] sm:$0xff]
    %v786 = vld [vmem:[#allocation8 + $0x128] sm:$0xff]
    %v787 = vld [vmem:[#allocation8 + $0x130] sm:$0xff]
    %v788 = vld [vmem:[#allocation8 + $0x138] sm:$0xff]
    %v789 = vld [vmem:[#allocation8 + $0x140] sm:$0xff]
    %v790 = vld [vmem:[#allocation8 + $0x148] sm:$0xff]
    %v791 = vld [vmem:[#allocation8 + $0x150] sm:$0xff]
    %v792 = vld [vmem:[#allocation8 + $0x158] sm:$0xff]
    %v793 = vld [vmem:[#allocation8 + $0x160] sm:$0xff]
    %v794 = vld [vmem:[#allocation8 + $0x168] sm:$0xff]
    %v795 = vld [vmem:[#allocation8 + $0x170] sm:$0xff]
    %v796 = vld [vmem:[#allocation8 + $0x178] sm:$0xff]
    %v797 = vld [vmem:[%s6] sm:$0x1]
    %v799 = vlaneseq
    %v800 = vshrl.u32 %v799, 7
    %v801 = vsub.s32 0, %v800
    %v802 = vrot.slane %v797, %v801
    %804 = vmatprep.subr.mxu0 0.0
    %805 = vmatpush1.msra.mxu0 %v749
    %806 = vmatprep.subr.mxu0 0.0
    %807 = vmatpush1.msra.mxu0 %v750
    %808 = vmatprep.subr.mxu0 0.0
    %809 = vmatpush1.msra.mxu0 %v751
    %810 = vmatprep.subr.mxu0 0.0
    %811 = vmatpush1.msra.mxu0 %v752
    %812 = vmatprep.subr.mxu0 0.0
    %813 = vmatpush1.msra.mxu0 %v753
    %814 = vmatprep.subr.mxu0 0.0
    %815 = vmatpush1.msra.mxu0 %v754
    %816 = vmatprep.subr.mxu0 0.0
    %817 = vmatpush1.msra.mxu0 %v755
    %818 = vmatprep.subr.mxu0 0.0
    %819 = vmatpush1.msra.mxu0 %v756
    %820 = vmatprep.subr.mxu0 0.0
    %821 = vmatpush1.msra.mxu0 %v757
    %822 = vmatprep.subr.mxu0 0.0
    %823 = vmatpush1.msra.mxu0 %v758
    %824 = vmatprep.subr.mxu0 0.0
    %825 = vmatpush1.msra.mxu0 %v759
    %826 = vmatprep.subr.mxu0 0.0
    %827 = vmatpush1.msra.mxu0 %v760
    %828 = vmatprep.subr.mxu0 0.0
    %829 = vmatpush1.msra.mxu0 %v761
    %830 = vmatprep.subr.mxu0 0.0
    %831 = vmatpush1.msra.mxu0 %v762
    %832 = vmatprep.subr.mxu0 0.0
    %833 = vmatpush1.msra.mxu0 %v763
    %834 = vmatprep.subr.mxu0 0.0
    %835 = vmatpush1.msra.mxu0 %v764
    %836 = vmatprep.subr.mxu0 0.0
    %837 = vmatpush1.msra.mxu0 %v765
    %838 = vmatprep.subr.mxu0 0.0
    %839 = vmatpush1.msra.mxu0 %v766
    %840 = vmatprep.subr.mxu0 0.0
    %841 = vmatpush1.msra.mxu0 %v767
    %842 = vmatprep.subr.mxu0 0.0
    %843 = vmatpush1.msra.mxu0 %v768
    %844 = vmatprep.subr.mxu0 0.0
    %845 = vmatpush1.msra.mxu0 %v769
    %846 = vmatprep.subr.mxu0 0.0
    %847 = vmatpush1.msra.mxu0 %v770
    %848 = vmatprep.subr.mxu0 0.0
    %849 = vmatpush1.msra.mxu0 %v771
    %850 = vmatprep.subr.mxu0 0.0
    %851 = vmatpush1.msra.mxu0 %v772
    %852 = vmatprep.subr.mxu0 0.0
    %853 = vmatpush1.msra.mxu0 %v773
    %854 = vmatprep.subr.mxu0 0.0
    %855 = vmatpush1.msra.mxu0 %v774
    %856 = vmatprep.subr.mxu0 0.0
    %857 = vmatpush1.msra.mxu0 %v775
    %858 = vmatprep.subr.mxu0 0.0
    %859 = vmatpush1.msra.mxu0 %v776
    %860 = vmatprep.subr.mxu0 0.0
    %861 = vmatpush1.msra.mxu0 %v777
    %862 = vmatprep.subr.mxu0 0.0
    %863 = vmatpush1.msra.mxu0 %v778
    %864 = vmatprep.subr.mxu0 0.0
    %865 = vmatpush1.msra.mxu0 %v779
    %866 = vmatprep.subr.mxu0 0.0
    %867 = vmatpush1.msra.mxu0 %v780
    %868 = vmatprep.mubr.f32.mxu0 %v747
    %869 = vmatmul.mubr.f32.gmra.mrb[0].mxu0 %v746
    %v870 = vpop.f32.mrb[0].mxu0
    %v871 = vadd.f32 %v802, %v870
    %v872 = vpop.f32.mrb[0].mxu0
    %873 = vdwg.mxu0
    %874 = vmatprep.subr.mxu0 0.0
    %875 = vmatpush1.msra.mxu0 %v781
    %876 = vmatprep.subr.mxu0 0.0
    %877 = vmatpush1.msra.mxu0 %v782
    %878 = vmatprep.subr.mxu0 0.0
    %879 = vmatpush1.msra.mxu0 %v783
    %880 = vmatprep.subr.mxu0 0.0
    %881 = vmatpush1.msra.mxu0 %v784
    %882 = vmatprep.subr.mxu0 0.0
    %883 = vmatpush1.msra.mxu0 %v785
    %884 = vmatprep.subr.mxu0 0.0
    %885 = vmatpush1.msra.mxu0 %v786
    %886 = vmatprep.subr.mxu0 0.0
    %887 = vmatpush1.msra.mxu0 %v787
    %888 = vmatprep.subr.mxu0 0.0
    %889 = vmatpush1.msra.mxu0 %v788
    %890 = vmatprep.subr.mxu0 0.0
    %891 = vmatpush1.msra.mxu0 %v789
    %892 = vmatprep.subr.mxu0 0.0
    %893 = vmatpush1.msra.mxu0 %v790
    %894 = vmatprep.subr.mxu0 0.0
    %895 = vmatpush1.msra.mxu0 %v791
    %896 = vmatprep.subr.mxu0 0.0
    %897 = vmatpush1.msra.mxu0 %v792
    %898 = vmatprep.subr.mxu0 0.0
    %899 = vmatpush1.msra.mxu0 %v793
    %900 = vmatprep.subr.mxu0 0.0
    %901 = vmatpush1.msra.mxu0 %v794
    %902 = vmatprep.subr.mxu0 0.0
    %903 = vmatpush1.msra.mxu0 %v795
    %904 = vmatprep.subr.mxu0 0.0
    %905 = vmatpush1.msra.mxu0 %v796
    %906 = vmatprep.subr.mxu0 0.0
    %907 = vmatpush1.msra.mxu0 0.0
    %908 = vmatprep.subr.mxu0 0.0
    %909 = vmatpush1.msra.mxu0 0.0
    %910 = vmatprep.subr.mxu0 0.0
    %911 = vmatpush1.msra.mxu0 0.0
    %912 = vmatprep.subr.mxu0 0.0
    %913 = vmatpush1.msra.mxu0 0.0
    %914 = vmatprep.subr.mxu0 0.0
    %915 = vmatpush1.msra.mxu0 0.0
    %916 = vmatprep.subr.mxu0 0.0
    %917 = vmatpush1.msra.mxu0 0.0
    %918 = vmatprep.subr.mxu0 0.0
    %919 = vmatpush1.msra.mxu0 0.0
    %920 = vmatprep.subr.mxu0 0.0
    %921 = vmatpush1.msra.mxu0 0.0
    %922 = vmatprep.subr.mxu0 0.0
    %923 = vmatpush1.msra.mxu0 0.0
    %924 = vmatprep.subr.mxu0 0.0
    %925 = vmatpush1.msra.mxu0 0.0
    %926 = vmatprep.subr.mxu0 0.0
    %927 = vmatpush1.msra.mxu0 0.0
    %928 = vmatprep.subr.mxu0 0.0
    %929 = vmatpush1.msra.mxu0 0.0
    %930 = vmatprep.subr.mxu0 0.0
    %931 = vmatpush1.msra.mxu0 0.0
    %932 = vmatprep.subr.mxu0 0.0
    %933 = vmatpush1.msra.mxu0 0.0
    %934 = vmatprep.subr.mxu0 0.0
    %935 = vmatpush1.msra.mxu0 0.0
    %936 = vmatprep.subr.mxu0 0.0
    %937 = vmatpush1.msra.mxu0 0.0
    %938 = vmatprep.mubr.f32.mxu0 0.0
    %939 = vmatmul.mubr.f32.gmra.mrb[0].mxu0 %v748
    %v940 = vpop.f32.mrb[0].mxu0
    %v941 = vadd.f32 %v871, %v940
    %v942 = vpop.f32.mrb[0].mxu0
    %943 = vdwg.mxu0
    %v944 = vtanh.pop %v941
    %945 = vst [vmem:[#allocation10] sm:$0xff] %v944
    // Predicated region
    $region46: #{tpu_custom_call.1} parent=1 // pred_check
      _
    $region47: #{tpu_custom_call.1} parent=1 // pred_check_branch
      %947 = sbr.rel (0) target = $region49
    $region48: #{tpu_custom_call.1} parent=1 // pred_region
      %s949 = ssub.s32 128, 128
      %950 = vsyncadd [#allocation4], %s949
      %s952 = sshll.u32 [#allocation10], 4
      %s953 = int_to_ptr.vmem [resolvable:$true] %s952
      %955 = dma.vmem_to_hbm [thread:$0]  %s953, 128, %s7, [#allocation4]
    $region49: #{tpu_custom_call.1} parent=1 // pred_fallthru
      _
    // Predicated region
    $region50: #{tpu_custom_call.1} parent=1 // pred_check
      _
    $region51: #{tpu_custom_call.1} parent=1 // pred_check_branch
      %957 = sbr.rel (0) target = $region53
    $region52: #{tpu_custom_call.1} parent=1 // pred_region
      %958 = dma.done [#allocation4], 128
    $region53: #{tpu_custom_call.1} parent=1 // pred_fallthru
      _
    %959 = vsyncpa [#allocation3], 1
    %960 = vsyncpa [#allocation6], 1
    %961 = vsyncpa [#allocation9], 1
    %962 = vsyncpa [#allocation4], 1

</llo_original>
